<compile_context>
chip_gen: v5e
topology: v5e:2x2
jax: 0.10.0
libtpu: 0.0.40
codegen_flags: <defaults>
</compile_context>

<pallas_src>
import numpy as np
import jax
import jax.numpy as jnp
from jax.experimental import pallas as pl
from jax.experimental.pallas import tpu as pltpu

# ------------------------- configuration (small demo sizes) -------------------
B = 2                      # batch
H = W = 16                 # spatial dims
HW = H * W                 # 256 pixels -> lane axis (multiple of 128)
N = B * HW                 # 512 lanes: batch folded into the lane axis
LEVELS = 4                 # number of dense modules
GROWTH = 16                # mlps[i]  : out channels of every level
C_EXTRA = 16               # mlps2[i] : channels of every extra input x[i]
# dense-concat channel layout: [x0, y0, x1, y1, x2, y2, x3] (contiguous, 16 each)
C_IN = [C_EXTRA + i * (GROWTH + C_EXTRA) for i in range(LEVELS)]  # 16,48,80,112
C_FULL = 128               # feat rows, padded to one 128-wide MXU/lane tile
ONE_ROW = C_FULL - 1       # constant-one feat row -> folded-bias weight column
PAD_ROWS = ONE_ROW - C_IN[-1]          # 15 zero pad rows between x3 and ones-row
BN_EPS = 1e-5


# ------------------------------ Pallas kernel ---------------------------------
def multi_dense_mlp_kernel(w_ref, slab_ref, out_ref, feat):
    # w_ref    : (LEVELS, GROWTH, C_FULL) bf16   BN+bias-folded 1x1 conv weights
    # slab_ref : (B, C_FULL, HW) bf16            x chunks pre-scattered, zeros in
    #                                            y/pad slots, ones in ONE_ROW
    # out_ref  : (B, GROWTH, HW) f32             lane-dense output
    # feat     : VMEM scratch (C_FULL, B*HW) bf16 (dense concat, batch on lanes)

    # Fold batch into the lane axis: two lane-tile-aligned (128-multiple) stores.
    for b in range(B):                                 # static (B = 2)
        feat[:, b * HW:(b + 1) * HW] = slab_ref[b]

    c = C_EXTRA
    y = None
    for i in range(LEVELS):                            # static unroll
        # One full-width MXU dot per level: (16,128) @ (128, 512).  Rows of feat
        # past the valid prefix are zero (from the slab); the ones-row picks up
        # the folded bias column of w_ref[i] -> no per-level broadcast/add.
        y = jnp.dot(w_ref[i], feat[...], preferred_element_type=jnp.float32)
        y = jnp.maximum(y, 0.0)                        # ReLU, kept in f32
        if i < LEVELS - 1:
            # dense concat: write y_i into its pre-reserved 16-row slot
            # (bf16 sublane-tile aligned offsets 16 / 48 / 80).
            feat[c:c + GROWTH, :] = y.astype(feat.dtype)
            c += GROWTH + C_EXTRA

    # Split the lane axis back into batches: 256-lane aligned, lane-dense stores.
    for b in range(B):
        out_ref[b] = y[:, b * HW:(b + 1) * HW]


# -------------------------------- wrapper --------------------------------------
@jax.jit
def multi_dense_mlp_forward(x_list, w_all):
    # x_list: LEVELS tensors (B, C_EXTRA, H, W) f32 ; w_all: (L, G, C_FULL) bf16
    # Returns (B, GROWTH, H, W) f32 (PyTorch convention).  No transposes anywhere.
    xs = [x.reshape(B, C_EXTRA, HW).astype(jnp.bfloat16) for x in x_list]

    # Build the dense slab host/XLA-side (fused under jit): one input DMA for the
    # kernel instead of 4, and no in-kernel iota/where init.
    y_slot = jnp.zeros((B, GROWTH, HW), jnp.bfloat16)
    parts = []
    for i in range(LEVELS):
        parts.append(xs[i])
        if i < LEVELS - 1:
            parts.append(y_slot)                       # y_i written in-kernel
    parts.append(jnp.zeros((B, PAD_ROWS, HW), jnp.bfloat16))   # pad rows (zero)
    parts.append(jnp.ones((B, 1, HW), jnp.bfloat16))           # ones -> bias
    slab = jnp.concatenate(parts, axis=1)              # (B, C_FULL, HW) bf16

    out = pl.pallas_call(
        multi_dense_mlp_kernel,
        out_shape=jax.ShapeDtypeStruct((B, GROWTH, HW), jnp.float32),
        grid_spec=pltpu.PrefetchScalarGridSpec(
            num_scalar_prefetch=0,
            grid=(1,),                                 # single step (1-TC chips)
            in_specs=[pl.BlockSpec((LEVELS, GROWTH, C_FULL), lambda i: (0, 0, 0)),
                      pl.BlockSpec((B, C_FULL, HW), lambda i: (0, 0, 0))],
            out_specs=pl.BlockSpec((B, GROWTH, HW), lambda i: (0, 0, 0)),
            scratch_shapes=[pltpu.VMEM((C_FULL, N), jnp.bfloat16)],
        ),
        compiler_params=pltpu.CompilerParams(
            dimension_semantics=("arbitrary",)),
    )(w_all, slab)

    return out.reshape(B, GROWTH, H, W)                # free reshape


# ----------------------- deterministic parameter init --------------------------
def init_folded_params(key):
    """Per level: Conv2d(1x1, bias=True) + BatchNorm2d params; fold BN (eval
    mode, running stats) and the conv bias into one bf16 weight block whose
    column ONE_ROW carries the folded bias (matched by the slab's ones-row)."""
    ws = []
    for i in range(LEVELS):
        cin = C_IN[i]
        key, k1, k2, k3, k4, k5, k6 = jax.random.split(key, 7)
        Wc = jax.random.normal(k1, (GROWTH, cin), jnp.float32) / np.sqrt(cin)
        bc = jax.random.normal(k2, (GROWTH,), jnp.float32) * 0.1
        gamma = jax.random.uniform(k3, (GROWTH,), jnp.float32, minval=0.5, maxval=1.5)
        beta = jax.random.normal(k4, (GROWTH,), jnp.float32) * 0.1
        rmean = jax.random.normal(k5, (GROWTH,), jnp.float32) * 0.1
        rvar = jax.random.uniform(k6, (GROWTH,), jnp.float32, minval=0.5, maxval=1.5)

        scale = gamma / jnp.sqrt(rvar + BN_EPS)
        W_eff = Wc * scale[:, None]                    # (G, cin)
        b_eff = scale * (bc - rmean) + beta            # (G,)

        w_pad = jnp.zeros((GROWTH, C_FULL), jnp.float32)
        w_pad = w_pad.at[:, :cin].set(W_eff)
        w_pad = w_pad.at[:, ONE_ROW].set(b_eff)        # bias <- ones-row of slab
        ws.append(w_pad)
    return jnp.stack(ws).astype(jnp.bfloat16)          # (L, G, C_FULL) bf16


# ------------------------------ pure-JAX reference -----------------------------
def reference_forward(x_list, w_all):
    """Mirrors the PyTorch forward (same bf16 quantization points as kernel)."""
    pc = x_list[0].reshape(B, C_EXTRA, HW).astype(jnp.bfloat16)   # (B, C, HW)
    y = None
    for i in range(LEVELS):
        cin = C_IN[i]
        Wi = w_all[i, :, :cin]                                    # (G, cin) bf16
        bi = w_all[i, :, ONE_ROW].astype(jnp.float32)             # (G,)
        y = jnp.einsum("gc,bcn->bgn", Wi, pc,
                       preferred_element_type=jnp.float32)
        y = jnp.maximum(y + bi[None, :, None], 0.0)               # ReLU(BN-folded)
        if i < LEVELS - 1:
            nxt = x_list[i + 1].reshape(B, C_EXTRA, HW).astype(jnp.bfloat16)
            pc = jnp.concatenate([pc, y.astype(jnp.bfloat16), nxt], axis=1)
    return y.reshape(B, GROWTH, H, W)


if __name__ == "__main__":
    key = jax.random.PRNGKey(0)
    kx, kp = jax.random.split(key)
    x_keys = jax.random.split(kx, LEVELS)
    x_list = [jax.random.normal(x_keys[i], (B, C_EXTRA, H, W), jnp.float32)
              for i in range(LEVELS)]
    w_all = init_folded_params(kp)

    out = multi_dense_mlp_forward(x_list, w_all)
    out = jax.block_until_ready(out)

    ref = reference_forward(x_list, w_all)
    assert out.shape == (B, GROWTH, H, W)
    np.testing.assert_allclose(np.asarray(out), np.asarray(ref),
                               rtol=1e-2, atol=1e-2)
    print("KERNEL_OK")
</pallas_src>

<mosaic_0001>
module attributes {stable_mosaic.version = 11 : i64} {
  func.func @multi_dense_mlp_kernel(%arg0: i32, %arg1: memref<4x16x128xbf16, #tpu.memory_space<vmem>>, %arg2: memref<2x128x256xbf16, #tpu.memory_space<vmem>>, %arg3: memref<2x16x256xf32, #tpu.memory_space<vmem>>, %arg4: memref<128x512xbf16, #tpu.memory_space<vmem>>) attributes {dimension_semantics = [#tpu.dimension_semantics<arbitrary>], iteration_bounds = array<i64: 1>, scalar_prefetch = 0 : i64, scratch_operands = 1 : i64, tpu.core_type = #tpu.core_type<tc>, window_params = [{pipeline_mode = #tpu.pipeline_mode<synchronous>, transform_indices = @transform_0, window_bounds = array<i64: 4, 16, 128>}, {pipeline_mode = #tpu.pipeline_mode<synchronous>, transform_indices = @transform_1, window_bounds = array<i64: 2, 128, 256>}, {pipeline_mode = #tpu.pipeline_mode<synchronous>, transform_indices = @transform_2, window_bounds = array<i64: 2, 16, 256>}]} {
    %c0 = arith.constant 0 : index
    %c0_0 = arith.constant 0 : index
    %c0_1 = arith.constant 0 : index
    %0 = vector.load %arg2[%c0, %c0_0, %c0_1] : memref<2x128x256xbf16, #tpu.memory_space<vmem>>, vector<1x128x256xbf16>
    %1 = vector.shape_cast %0 : vector<1x128x256xbf16> to vector<128x256xbf16>
    %c0_2 = arith.constant 0 : index
    %c0_3 = arith.constant 0 : index
    %2 = vector.load %arg4[%c0_2, %c0_3] : memref<128x512xbf16, #tpu.memory_space<vmem>>, vector<128x256xbf16>
    tpu.vector_store %arg4[%c0_2, %c0_3], %1 {strides = array<i32>} : memref<128x512xbf16, #tpu.memory_space<vmem>>, vector<128x256xbf16>,
    %c1 = arith.constant 1 : index
    %c0_4 = arith.constant 0 : index
    %c0_5 = arith.constant 0 : index
    %3 = vector.load %arg2[%c1, %c0_4, %c0_5] : memref<2x128x256xbf16, #tpu.memory_space<vmem>>, vector<1x128x256xbf16>
    %4 = vector.shape_cast %3 : vector<1x128x256xbf16> to vector<128x256xbf16>
    %c0_6 = arith.constant 0 : index
    %c256 = arith.constant 256 : index
    %5 = vector.load %arg4[%c0_6, %c256] : memref<128x512xbf16, #tpu.memory_space<vmem>>, vector<128x256xbf16>
    tpu.vector_store %arg4[%c0_6, %c256], %4 {strides = array<i32>} : memref<128x512xbf16, #tpu.memory_space<vmem>>, vector<128x256xbf16>,
    %c0_7 = arith.constant 0 : index
    %c0_8 = arith.constant 0 : index
    %c0_9 = arith.constant 0 : index
    %6 = vector.load %arg1[%c0_7, %c0_8, %c0_9] : memref<4x16x128xbf16, #tpu.memory_space<vmem>>, vector<1x16x128xbf16>
    %7 = vector.shape_cast %6 : vector<1x16x128xbf16> to vector<16x128xbf16>
    %c0_10 = arith.constant 0 : index
    %c0_11 = arith.constant 0 : index
    %8 = vector.load %arg4[%c0_10, %c0_11] : memref<128x512xbf16, #tpu.memory_space<vmem>>, vector<128x512xbf16>
    %cst = arith.constant dense<0.000000e+00> : vector<16x512xf32>
    %9 = tpu.matmul %7, %8, %cst {dimension_numbers = #tpu.dot_dimension_numbers<[1], [0], [0], [1], [0, 0, 1, 1], [], []>} : vector<16x128xbf16>, vector<128x512xbf16>, vector<16x512xf32> -> vector<16x512xf32>
    %cst_12 = arith.constant 0.000000e+00 : f32
    %10 = vector.broadcast %cst_12 : f32 to vector<16x512xf32>
    %11 = arith.maximumf %9, %10 : vector<16x512xf32>
    %12 = arith.truncf %11 : vector<16x512xf32> to vector<16x512xbf16>
    %c16 = arith.constant 16 : index
    %c0_13 = arith.constant 0 : index
    %13 = vector.load %arg4[%c16, %c0_13] : memref<128x512xbf16, #tpu.memory_space<vmem>>, vector<16x512xbf16>
    tpu.vector_store %arg4[%c16, %c0_13], %12 {strides = array<i32>} : memref<128x512xbf16, #tpu.memory_space<vmem>>, vector<16x512xbf16>,
    %c1_14 = arith.constant 1 : index
    %c0_15 = arith.constant 0 : index
    %c0_16 = arith.constant 0 : index
    %14 = vector.load %arg1[%c1_14, %c0_15, %c0_16] : memref<4x16x128xbf16, #tpu.memory_space<vmem>>, vector<1x16x128xbf16>
    %15 = vector.shape_cast %14 : vector<1x16x128xbf16> to vector<16x128xbf16>
    %c0_17 = arith.constant 0 : index
    %c0_18 = arith.constant 0 : index
    %16 = vector.load %arg4[%c0_17, %c0_18] : memref<128x512xbf16, #tpu.memory_space<vmem>>, vector<128x512xbf16>
    %cst_19 = arith.constant dense<0.000000e+00> : vector<16x512xf32>
    %17 = tpu.matmul %15, %16, %cst_19 {dimension_numbers = #tpu.dot_dimension_numbers<[1], [0], [0], [1], [0, 0, 1, 1], [], []>} : vector<16x128xbf16>, vector<128x512xbf16>, vector<16x512xf32> -> vector<16x512xf32>
    %cst_20 = arith.constant 0.000000e+00 : f32
    %18 = vector.broadcast %cst_20 : f32 to vector<16x512xf32>
    %19 = arith.maximumf %17, %18 : vector<16x512xf32>
    %20 = arith.truncf %19 : vector<16x512xf32> to vector<16x512xbf16>
    %c48 = arith.constant 48 : index
    %c0_21 = arith.constant 0 : index
    %21 = vector.load %arg4[%c48, %c0_21] : memref<128x512xbf16, #tpu.memory_space<vmem>>, vector<16x512xbf16>
    tpu.vector_store %arg4[%c48, %c0_21], %20 {strides = array<i32>} : memref<128x512xbf16, #tpu.memory_space<vmem>>, vector<16x512xbf16>,
    %c2 = arith.constant 2 : index
    %c0_22 = arith.constant 0 : index
    %c0_23 = arith.constant 0 : index
    %22 = vector.load %arg1[%c2, %c0_22, %c0_23] : memref<4x16x128xbf16, #tpu.memory_space<vmem>>, vector<1x16x128xbf16>
    %23 = vector.shape_cast %22 : vector<1x16x128xbf16> to vector<16x128xbf16>
    %c0_24 = arith.constant 0 : index
    %c0_25 = arith.constant 0 : index
    %24 = vector.load %arg4[%c0_24, %c0_25] : memref<128x512xbf16, #tpu.memory_space<vmem>>, vector<128x512xbf16>
    %cst_26 = arith.constant dense<0.000000e+00> : vector<16x512xf32>
    %25 = tpu.matmul %23, %24, %cst_26 {dimension_numbers = #tpu.dot_dimension_numbers<[1], [0], [0], [1], [0, 0, 1, 1], [], []>} : vector<16x128xbf16>, vector<128x512xbf16>, vector<16x512xf32> -> vector<16x512xf32>
    %cst_27 = arith.constant 0.000000e+00 : f32
    %26 = vector.broadcast %cst_27 : f32 to vector<16x512xf32>
    %27 = arith.maximumf %25, %26 : vector<16x512xf32>
    %28 = arith.truncf %27 : vector<16x512xf32> to vector<16x512xbf16>
    %c80 = arith.constant 80 : index
    %c0_28 = arith.constant 0 : index
    %29 = vector.load %arg4[%c80, %c0_28] : memref<128x512xbf16, #tpu.memory_space<vmem>>, vector<16x512xbf16>
    tpu.vector_store %arg4[%c80, %c0_28], %28 {strides = array<i32>} : memref<128x512xbf16, #tpu.memory_space<vmem>>, vector<16x512xbf16>,
    %c3 = arith.constant 3 : index
    %c0_29 = arith.constant 0 : index
    %c0_30 = arith.constant 0 : index
    %30 = vector.load %arg1[%c3, %c0_29, %c0_30] : memref<4x16x128xbf16, #tpu.memory_space<vmem>>, vector<1x16x128xbf16>
    %31 = vector.shape_cast %30 : vector<1x16x128xbf16> to vector<16x128xbf16>
    %c0_31 = arith.constant 0 : index
    %c0_32 = arith.constant 0 : index
    %32 = vector.load %arg4[%c0_31, %c0_32] : memref<128x512xbf16, #tpu.memory_space<vmem>>, vector<128x512xbf16>
    %cst_33 = arith.constant dense<0.000000e+00> : vector<16x512xf32>
    %33 = tpu.matmul %31, %32, %cst_33 {dimension_numbers = #tpu.dot_dimension_numbers<[1], [0], [0], [1], [0, 0, 1, 1], [], []>} : vector<16x128xbf16>, vector<128x512xbf16>, vector<16x512xf32> -> vector<16x512xf32>
    %cst_34 = arith.constant 0.000000e+00 : f32
    %34 = vector.broadcast %cst_34 : f32 to vector<16x512xf32>
    %35 = arith.maximumf %33, %34 : vector<16x512xf32>
    %36 = vector.extract_strided_slice %35 {offsets = [0, 0], sizes = [16, 256], strides = [1, 1]} : vector<16x512xf32> to vector<16x256xf32>
    %c0_35 = arith.constant 0 : index
    %c0_36 = arith.constant 0 : index
    %c0_37 = arith.constant 0 : index
    %37 = vector.load %arg3[%c0_35, %c0_36, %c0_37] : memref<2x16x256xf32, #tpu.memory_space<vmem>>, vector<1x16x256xf32>
    %38 = vector.shape_cast %37 : vector<1x16x256xf32> to vector<16x256xf32>
    %39 = vector.shape_cast %36 : vector<16x256xf32> to vector<1x16x256xf32>
    tpu.vector_store %arg3[%c0_35, %c0_36, %c0_37], %39 {strides = array<i32>} : memref<2x16x256xf32, #tpu.memory_space<vmem>>, vector<1x16x256xf32>,
    %40 = vector.extract_strided_slice %35 {offsets = [0, 256], sizes = [16, 256], strides = [1, 1]} : vector<16x512xf32> to vector<16x256xf32>
    %c1_38 = arith.constant 1 : index
    %c0_39 = arith.constant 0 : index
    %c0_40 = arith.constant 0 : index
    %41 = vector.load %arg3[%c1_38, %c0_39, %c0_40] : memref<2x16x256xf32, #tpu.memory_space<vmem>>, vector<1x16x256xf32>
    %42 = vector.shape_cast %41 : vector<1x16x256xf32> to vector<16x256xf32>
    %43 = vector.shape_cast %40 : vector<16x256xf32> to vector<1x16x256xf32>
    tpu.vector_store %arg3[%c1_38, %c0_39, %c0_40], %43 {strides = array<i32>} : memref<2x16x256xf32, #tpu.memory_space<vmem>>, vector<1x16x256xf32>,
    return
  }
  func.func @transform_0(%arg0: i32) -> (i32, i32, i32) {
    %c0_i32 = arith.constant 0 : i32
    %c0_i32_0 = arith.constant 0 : i32
    %c0_i32_1 = arith.constant 0 : i32
    %c0_i32_2 = arith.constant 0 : i32
    return %c0_i32, %c0_i32_0, %c0_i32_1 : i32, i32, i32
  }
  func.func @transform_1(%arg0: i32) -> (i32, i32, i32) {
    %c0_i32 = arith.constant 0 : i32
    %c0_i32_0 = arith.constant 0 : i32
    %c0_i32_1 = arith.constant 0 : i32
    %c0_i32_2 = arith.constant 0 : i32
    return %c0_i32, %c0_i32_0, %c0_i32_1 : i32, i32, i32
  }
  func.func @transform_2(%arg0: i32) -> (i32, i32, i32) {
    %c0_i32 = arith.constant 0 : i32
    %c0_i32_0 = arith.constant 0 : i32
    %c0_i32_1 = arith.constant 0 : i32
    %c0_i32_2 = arith.constant 0 : i32
    return %c0_i32, %c0_i32_0, %c0_i32_1 : i32, i32, i32
  }
}

</mosaic_0001>

<llo_original>
// kernel: multi_dense_mlp_forward.1
$region0: #{multi_dense_mlp_forward.1}
  #allocation0 [shape = 'u32[]', space=smem, size = 0x4, offset = 0x4, fixed_abs, tag = 'smem constant byte address 0x4 - core index']
  #allocation1 [shape = 'u32[72,128]{1,0:T(1,128)}', space=vmem, size = 0x9000, scoped, tag = 'internal scratch']
  #allocation2 [shape = 'bf16[128,512]{1,0:T(8,128)(2,1)}', space=vmem, size = 0x20000, scoped, tag = 'scratch operand']
  %s0 = inlined_call_operand.vmem [shape: bf16[4,16,128], index: 0, kind: input, shape index: {}]
  %s1 = inlined_call_operand.vmem [shape: bf16[2,128,256], index: 1, kind: input, shape index: {}]
  %s2 = inlined_call_operand.vmem [shape: f32[2,16,256], index: 2, kind: output, shape index: {}]
  %s3 = sld [smem:[#allocation0]]
  $region18: #{multi_dense_mlp_forward.1} parent=0
    _
  %s5 = ssub.s32 1, %s3
  %s6 = scalar_select 0, %s5, %s3
  // Predicated region
  $region2: #{multi_dense_mlp_forward.1} parent=0 // pred_check
    _
  $region3: #{multi_dense_mlp_forward.1} parent=0 // pred_check_branch
    %8 = sbr.rel (0) target = $region5
  $region4: #{multi_dense_mlp_forward.1} parent=0 // pred_region
    _
  $region5: #{multi_dense_mlp_forward.1} parent=0 // pred_fallthru
    _
  // Predicated region
  $region6: #{multi_dense_mlp_forward.1} parent=0 // pred_check
    _
  $region7: #{multi_dense_mlp_forward.1} parent=0 // pred_check_branch
    %10 = sbr.rel (0) target = $region9
  $region8: #{multi_dense_mlp_forward.1} parent=0 // pred_region
    _
  $region9: #{multi_dense_mlp_forward.1} parent=0 // pred_fallthru
    _
  %v11 = vld [vmem:[%s1] sm:$0xff]
  %v12 = vld [vmem:[%s1 + $0x8] sm:$0xff]
  %v13 = vld [vmem:[%s1 + $0x10] sm:$0xff]
  %v14 = vld [vmem:[%s1 + $0x18] sm:$0xff]
  %v15 = vld [vmem:[%s1 + $0x20] sm:$0xff]
  %v16 = vld [vmem:[%s1 + $0x28] sm:$0xff]
  %v17 = vld [vmem:[%s1 + $0x30] sm:$0xff]
  %v18 = vld [vmem:[%s1 + $0x38] sm:$0xff]
  %v19 = vld [vmem:[%s1 + $0x40] sm:$0xff]
  %v20 = vld [vmem:[%s1 + $0x48] sm:$0xff]
  %v21 = vld [vmem:[%s1 + $0x50] sm:$0xff]
  %v22 = vld [vmem:[%s1 + $0x58] sm:$0xff]
  %v23 = vld [vmem:[%s1 + $0x60] sm:$0xff]
  %v24 = vld [vmem:[%s1 + $0x68] sm:$0xff]
  %v25 = vld [vmem:[%s1 + $0x70] sm:$0xff]
  %v26 = vld [vmem:[%s1 + $0x78] sm:$0xff]
  %27 = vst [vmem:[#allocation2] sm:$0xff] %v11
  %28 = vst [vmem:[#allocation2 + $0x10] sm:$0xff] %v12
  %29 = vst [vmem:[#allocation2 + $0x20] sm:$0xff] %v13
  %30 = vst [vmem:[#allocation2 + $0x30] sm:$0xff] %v14
  %31 = vst [vmem:[#allocation2 + $0x40] sm:$0xff] %v15
  %32 = vst [vmem:[#allocation2 + $0x50] sm:$0xff] %v16
  %33 = vst [vmem:[#allocation2 + $0x60] sm:$0xff] %v17
  %34 = vst [vmem:[#allocation2 + $0x70] sm:$0xff] %v18
  %35 = vst [vmem:[#allocation2 + $0x80] sm:$0xff] %v19
  %36 = vst [vmem:[#allocation2 + $0x90] sm:$0xff] %v20
  %37 = vst [vmem:[#allocation2 + $0xa0] sm:$0xff] %v21
  %38 = vst [vmem:[#allocation2 + $0xb0] sm:$0xff] %v22
  %39 = vst [vmem:[#allocation2 + $0xc0] sm:$0xff] %v23
  %40 = vst [vmem:[#allocation2 + $0xd0] sm:$0xff] %v24
  %41 = vst [vmem:[#allocation2 + $0xe0] sm:$0xff] %v25
  %42 = vst [vmem:[#allocation2 + $0xf0] sm:$0xff] %v26
  %s43 = scalar_lea.vmem %s1, 128
  %v44 = vld [vmem:[%s43] sm:$0xff]
  %v45 = vld [vmem:[%s43 + $0x8] sm:$0xff]
  %v46 = vld [vmem:[%s43 + $0x10] sm:$0xff]
  %v47 = vld [vmem:[%s43 + $0x18] sm:$0xff]
  %v48 = vld [vmem:[%s43 + $0x20] sm:$0xff]
  %v49 = vld [vmem:[%s43 + $0x28] sm:$0xff]
  %v50 = vld [vmem:[%s43 + $0x30] sm:$0xff]
  %v51 = vld [vmem:[%s43 + $0x38] sm:$0xff]
  %v52 = vld [vmem:[%s43 + $0x40] sm:$0xff]
  %v53 = vld [vmem:[%s43 + $0x48] sm:$0xff]
  %v54 = vld [vmem:[%s43 + $0x50] sm:$0xff]
  %v55 = vld [vmem:[%s43 + $0x58] sm:$0xff]
  %v56 = vld [vmem:[%s43 + $0x60] sm:$0xff]
  %v57 = vld [vmem:[%s43 + $0x68] sm:$0xff]
  %v58 = vld [vmem:[%s43 + $0x70] sm:$0xff]
  %v59 = vld [vmem:[%s43 + $0x78] sm:$0xff]
  %60 = vst [vmem:[#allocation2 + $0x8] sm:$0xff] %v44
  %61 = vst [vmem:[#allocation2 + $0x18] sm:$0xff] %v45
  %62 = vst [vmem:[#allocation2 + $0x28] sm:$0xff] %v46
  %63 = vst [vmem:[#allocation2 + $0x38] sm:$0xff] %v47
  %64 = vst [vmem:[#allocation2 + $0x48] sm:$0xff] %v48
  %65 = vst [vmem:[#allocation2 + $0x58] sm:$0xff] %v49
  %66 = vst [vmem:[#allocation2 + $0x68] sm:$0xff] %v50
  %67 = vst [vmem:[#allocation2 + $0x78] sm:$0xff] %v51
  %68 = vst [vmem:[#allocation2 + $0x88] sm:$0xff] %v52
  %69 = vst [vmem:[#allocation2 + $0x98] sm:$0xff] %v53
  %70 = vst [vmem:[#allocation2 + $0xa8] sm:$0xff] %v54
  %71 = vst [vmem:[#allocation2 + $0xb8] sm:$0xff] %v55
  %72 = vst [vmem:[#allocation2 + $0xc8] sm:$0xff] %v56
  %73 = vst [vmem:[#allocation2 + $0xd8] sm:$0xff] %v57
  %74 = vst [vmem:[#allocation2 + $0xe8] sm:$0xff] %v58
  %75 = vst [vmem:[#allocation2 + $0xf8] sm:$0xff] %v59
  %v76 = vld [vmem:[%s0] sm:$0xf]
  %v77 = vld [vmem:[%s0 + $0x4] sm:$0xf]
  %v78 = vld [vmem:[#allocation2] sm:$0xff]
  %v79 = vld [vmem:[#allocation2 + $0x8] sm:$0xff]
  %v80 = vld [vmem:[#allocation2 + $0x10] sm:$0xff]
  %v81 = vld [vmem:[#allocation2 + $0x18] sm:$0xff]
  %v82 = vld [vmem:[#allocation2 + $0x20] sm:$0xff]
  %v83 = vld [vmem:[#allocation2 + $0x28] sm:$0xff]
  %v84 = vld [vmem:[#allocation2 + $0x30] sm:$0xff]
  %v85 = vld [vmem:[#allocation2 + $0x38] sm:$0xff]
  %v86 = vld [vmem:[#allocation2 + $0x40] sm:$0xff]
  %v87 = vld [vmem:[#allocation2 + $0x48] sm:$0xff]
  %v88 = vld [vmem:[#allocation2 + $0x50] sm:$0xff]
  %v89 = vld [vmem:[#allocation2 + $0x58] sm:$0xff]
  %v90 = vld [vmem:[#allocation2 + $0x60] sm:$0xff]
  %v91 = vld [vmem:[#allocation2 + $0x68] sm:$0xff]
  %v92 = vld [vmem:[#allocation2 + $0x70] sm:$0xff]
  %v93 = vld [vmem:[#allocation2 + $0x78] sm:$0xff]
  %v94 = vld [vmem:[#allocation2 + $0x80] sm:$0xff]
  %v95 = vld [vmem:[#allocation2 + $0x88] sm:$0xff]
  %v96 = vld [vmem:[#allocation2 + $0x90] sm:$0xff]
  %v97 = vld [vmem:[#allocation2 + $0x98] sm:$0xff]
  %v98 = vld [vmem:[#allocation2 + $0xa0] sm:$0xff]
  %v99 = vld [vmem:[#allocation2 + $0xa8] sm:$0xff]
  %v100 = vld [vmem:[#allocation2 + $0xb0] sm:$0xff]
  %v101 = vld [vmem:[#allocation2 + $0xb8] sm:$0xff]
  %v102 = vld [vmem:[#allocation2 + $0xc0] sm:$0xff]
  %v103 = vld [vmem:[#allocation2 + $0xc8] sm:$0xff]
  %v104 = vld [vmem:[#allocation2 + $0xd0] sm:$0xff]
  %v105 = vld [vmem:[#allocation2 + $0xd8] sm:$0xff]
  %v106 = vld [vmem:[#allocation2 + $0xe0] sm:$0xff]
  %v107 = vld [vmem:[#allocation2 + $0xe8] sm:$0xff]
  %v108 = vld [vmem:[#allocation2 + $0xf0] sm:$0xff]
  %v109 = vld [vmem:[#allocation2 + $0xf8] sm:$0xff]
  %v112 = vunpack.c.l.b16 %v76
  %v113 = vunpack.c.l.b16 %v77
  %v114 = vpack.c.b16 %v113, %v112
  %v148 = vunpack.c.l.b16 %v78
  %v149 = vunpack.c.h.b16 %v78
  %v150 = vunpack.c.l.b16 %v79
  %v151 = vunpack.c.h.b16 %v79
  %v152 = vunpack.c.l.b16 %v80
  %v153 = vunpack.c.h.b16 %v80
  %v154 = vunpack.c.l.b16 %v81
  %v155 = vunpack.c.h.b16 %v81
  %v156 = vunpack.c.l.b16 %v82
  %v157 = vunpack.c.h.b16 %v82
  %v158 = vunpack.c.l.b16 %v83
  %v159 = vunpack.c.h.b16 %v83
  %v160 = vunpack.c.l.b16 %v84
  %v161 = vunpack.c.h.b16 %v84
  %v162 = vunpack.c.l.b16 %v85
  %v163 = vunpack.c.h.b16 %v85
  %v164 = vunpack.c.l.b16 %v86
  %v165 = vunpack.c.h.b16 %v86
  %v166 = vunpack.c.l.b16 %v87
  %v167 = vunpack.c.h.b16 %v87
  %v168 = vunpack.c.l.b16 %v88
  %v169 = vunpack.c.h.b16 %v88
  %v170 = vunpack.c.l.b16 %v89
  %v171 = vunpack.c.h.b16 %v89
  %v172 = vunpack.c.l.b16 %v90
  %v173 = vunpack.c.h.b16 %v90
  %v174 = vunpack.c.l.b16 %v91
  %v175 = vunpack.c.h.b16 %v91
  %v176 = vunpack.c.l.b16 %v92
  %v177 = vunpack.c.h.b16 %v92
  %v178 = vunpack.c.l.b16 %v93
  %v179 = vunpack.c.h.b16 %v93
  %v180 = vunpack.c.l.b16 %v94
  %v181 = vunpack.c.h.b16 %v94
  %v182 = vunpack.c.l.b16 %v95
  %v183 = vunpack.c.h.b16 %v95
  %v184 = vunpack.c.l.b16 %v96
  %v185 = vunpack.c.h.b16 %v96
  %v186 = vunpack.c.l.b16 %v97
  %v187 = vunpack.c.h.b16 %v97
  %v188 = vunpack.c.l.b16 %v98
  %v189 = vunpack.c.h.b16 %v98
  %v190 = vunpack.c.l.b16 %v99
  %v191 = vunpack.c.h.b16 %v99
  %v192 = vunpack.c.l.b16 %v100
  %v193 = vunpack.c.h.b16 %v100
  %v194 = vunpack.c.l.b16 %v101
  %v195 = vunpack.c.h.b16 %v101
  %v196 = vunpack.c.l.b16 %v102
  %v197 = vunpack.c.h.b16 %v102
  %v198 = vunpack.c.l.b16 %v103
  %v199 = vunpack.c.h.b16 %v103
  %v200 = vunpack.c.l.b16 %v104
  %v201 = vunpack.c.h.b16 %v104
  %v202 = vunpack.c.l.b16 %v105
  %v203 = vunpack.c.h.b16 %v105
  %v204 = vunpack.c.l.b16 %v106
  %v205 = vunpack.c.h.b16 %v106
  %v206 = vunpack.c.l.b16 %v107
  %v207 = vunpack.c.h.b16 %v107
  %v208 = vunpack.c.l.b16 %v108
  %v209 = vunpack.c.h.b16 %v108
  %v210 = vunpack.c.l.b16 %v109
  %v211 = vunpack.c.h.b16 %v109
  %v212 = vpack.c.b16 %v152, %v148
  %v213 = vpack.c.b16 %v153, %v149
  %v214 = vpack.c.b16 %v154, %v150
  %v215 = vpack.c.b16 %v155, %v151
  %v216 = vpack.c.b16 %v160, %v156
  %v217 = vpack.c.b16 %v161, %v157
  %v218 = vpack.c.b16 %v162, %v158
  %v219 = vpack.c.b16 %v163, %v159
  %v220 = vpack.c.b16 %v168, %v164
  %v221 = vpack.c.b16 %v169, %v165
  %v222 = vpack.c.b16 %v170, %v166
  %v223 = vpack.c.b16 %v171, %v167
  %v224 = vpack.c.b16 %v176, %v172
  %v225 = vpack.c.b16 %v177, %v173
  %v226 = vpack.c.b16 %v178, %v174
  %v227 = vpack.c.b16 %v179, %v175
  %v228 = vpack.c.b16 %v184, %v180
  %v229 = vpack.c.b16 %v185, %v181
  %v230 = vpack.c.b16 %v186, %v182
  %v231 = vpack.c.b16 %v187, %v183
  %v232 = vpack.c.b16 %v192, %v188
  %v233 = vpack.c.b16 %v193, %v189
  %v234 = vpack.c.b16 %v194, %v190
  %v235 = vpack.c.b16 %v195, %v191
  %v236 = vpack.c.b16 %v200, %v196
  %v237 = vpack.c.b16 %v201, %v197
  %v238 = vpack.c.b16 %v202, %v198
  %v239 = vpack.c.b16 %v203, %v199
  %v240 = vpack.c.b16 %v208, %v204
  %v241 = vpack.c.b16 %v209, %v205
  %v242 = vpack.c.b16 %v210, %v206
  %v243 = vpack.c.b16 %v211, %v207
  %276 = vmatpush.bf16.msra.mxu0 %v240
  %277 = vmatpush.bf16.msra.mxu0 %v236
  %278 = vmatpush.bf16.msra.mxu0 %v232
  %279 = vmatpush.bf16.msra.mxu0 %v228
  %280 = vmatpush.bf16.msra.mxu0 %v224
  %281 = vmatpush.bf16.msra.mxu0 %v220
  %282 = vmatpush.bf16.msra.mxu0 %v216
  %283 = vmatpush.bf16.msra.mxu0 %v212
  %284 = vmatmul.bf16.gmra.mxu0 %v114
  %v285 = vpop.f32.mrf.mxu0
  %v286 = vadd.f32 0.0, %v285
  %v287 = vpop.f32.mrf.mxu0
  %v288 = vadd.f32 0.0, %v287
  %289 = vdwg.mxu0
  %290 = vmatpush.bf16.msra.mxu0 %v241
  %291 = vmatpush.bf16.msra.mxu0 %v237
  %292 = vmatpush.bf16.msra.mxu0 %v233
  %293 = vmatpush.bf16.msra.mxu0 %v229
  %294 = vmatpush.bf16.msra.mxu0 %v225
  %295 = vmatpush.bf16.msra.mxu0 %v221
  %296 = vmatpush.bf16.msra.mxu0 %v217
  %297 = vmatpush.bf16.msra.mxu0 %v213
  %298 = vmatmul.bf16.gmra.mxu0 %v114
  %v299 = vpop.f32.mrf.mxu0
  %v300 = vadd.f32 0.0, %v299
  %v301 = vpop.f32.mrf.mxu0
  %v302 = vadd.f32 0.0, %v301
  %303 = vdwg.mxu0
  %304 = vmatpush.bf16.msra.mxu0 %v242
  %305 = vmatpush.bf16.msra.mxu0 %v238
  %306 = vmatpush.bf16.msra.mxu0 %v234
  %307 = vmatpush.bf16.msra.mxu0 %v230
  %308 = vmatpush.bf16.msra.mxu0 %v226
  %309 = vmatpush.bf16.msra.mxu0 %v222
  %310 = vmatpush.bf16.msra.mxu0 %v218
  %311 = vmatpush.bf16.msra.mxu0 %v214
  %312 = vmatmul.bf16.gmra.mxu0 %v114
  %v313 = vpop.f32.mrf.mxu0
  %v314 = vadd.f32 0.0, %v313
  %v315 = vpop.f32.mrf.mxu0
  %v316 = vadd.f32 0.0, %v315
  %317 = vdwg.mxu0
  %318 = vmatpush.bf16.msra.mxu0 %v243
  %319 = vmatpush.bf16.msra.mxu0 %v239
  %320 = vmatpush.bf16.msra.mxu0 %v235
  %321 = vmatpush.bf16.msra.mxu0 %v231
  %322 = vmatpush.bf16.msra.mxu0 %v227
  %323 = vmatpush.bf16.msra.mxu0 %v223
  %324 = vmatpush.bf16.msra.mxu0 %v219
  %325 = vmatpush.bf16.msra.mxu0 %v215
  %326 = vmatmul.bf16.gmra.mxu0 %v114
  %v327 = vpop.f32.mrf.mxu0
  %v328 = vadd.f32 0.0, %v327
  %v329 = vpop.f32.mrf.mxu0
  %v330 = vadd.f32 0.0, %v329
  %331 = vdwg.mxu0
  %v332 = vmax.f32 %v286, 0.0
  %v333 = vmax.f32 %v300, 0.0
  %v334 = vmax.f32 %v314, 0.0
  %v335 = vmax.f32 %v328, 0.0
  %v336 = vmax.f32 %v288, 0.0
  %v337 = vmax.f32 %v302, 0.0
  %v338 = vmax.f32 %v316, 0.0
  %v339 = vmax.f32 %v330, 0.0
  %v340 = vpack.c.bf16 %v333, %v332
  %v341 = vpack.c.bf16 %v335, %v334
  %v342 = vpack.c.bf16 %v337, %v336
  %v343 = vpack.c.bf16 %v339, %v338
  %344 = vst [vmem:[#allocation2 + $0x20] sm:$0xff] %v340
  %345 = vst [vmem:[#allocation2 + $0x28] sm:$0xff] %v341
  %346 = vst [vmem:[#allocation2 + $0x30] sm:$0xff] %v342
  %347 = vst [vmem:[#allocation2 + $0x38] sm:$0xff] %v343
  %s348 = scalar_lea.vmem %s0, 8
  %v349 = vld [vmem:[%s348] sm:$0xf]
  %v350 = vld [vmem:[%s348 + $0x4] sm:$0xf]
  %v351 = vld [vmem:[#allocation2] sm:$0xff]
  %v352 = vld [vmem:[#allocation2 + $0x8] sm:$0xff]
  %v353 = vld [vmem:[#allocation2 + $0x10] sm:$0xff]
  %v354 = vld [vmem:[#allocation2 + $0x18] sm:$0xff]
  %v355 = vld [vmem:[#allocation2 + $0x20] sm:$0xff]
  %v356 = vld [vmem:[#allocation2 + $0x28] sm:$0xff]
  %v357 = vld [vmem:[#allocation2 + $0x30] sm:$0xff]
  %v358 = vld [vmem:[#allocation2 + $0x38] sm:$0xff]
  %v359 = vld [vmem:[#allocation2 + $0x40] sm:$0xff]
  %v360 = vld [vmem:[#allocation2 + $0x48] sm:$0xff]
  %v361 = vld [vmem:[#allocation2 + $0x50] sm:$0xff]
  %v362 = vld [vmem:[#allocation2 + $0x58] sm:$0xff]
  %v363 = vld [vmem:[#allocation2 + $0x60] sm:$0xff]
  %v364 = vld [vmem:[#allocation2 + $0x68] sm:$0xff]
  %v365 = vld [vmem:[#allocation2 + $0x70] sm:$0xff]
  %v366 = vld [vmem:[#allocation2 + $0x78] sm:$0xff]
  %v367 = vld [vmem:[#allocation2 + $0x80] sm:$0xff]
  %v368 = vld [vmem:[#allocation2 + $0x88] sm:$0xff]
  %v369 = vld [vmem:[#allocation2 + $0x90] sm:$0xff]
  %v370 = vld [vmem:[#allocation2 + $0x98] sm:$0xff]
  %v371 = vld [vmem:[#allocation2 + $0xa0] sm:$0xff]
  %v372 = vld [vmem:[#allocation2 + $0xa8] sm:$0xff]
  %v373 = vld [vmem:[#allocation2 + $0xb0] sm:$0xff]
  %v374 = vld [vmem:[#allocation2 + $0xb8] sm:$0xff]
  %v375 = vld [vmem:[#allocation2 + $0xc0] sm:$0xff]
  %v376 = vld [vmem:[#allocation2 + $0xc8] sm:$0xff]
  %v377 = vld [vmem:[#allocation2 + $0xd0] sm:$0xff]
  %v378 = vld [vmem:[#allocation2 + $0xd8] sm:$0xff]
  %v379 = vld [vmem:[#allocation2 + $0xe0] sm:$0xff]
  %v380 = vld [vmem:[#allocation2 + $0xe8] sm:$0xff]
  %v381 = vld [vmem:[#allocation2 + $0xf0] sm:$0xff]
  %v382 = vld [vmem:[#allocation2 + $0xf8] sm:$0xff]
  %v385 = vunpack.c.l.b16 %v349
  %v386 = vunpack.c.l.b16 %v350
  %v387 = vpack.c.b16 %v386, %v385
  %v421 = vunpack.c.l.b16 %v351
  %v422 = vunpack.c.h.b16 %v351
  %v423 = vunpack.c.l.b16 %v352
  %v424 = vunpack.c.h.b16 %v352
  %v425 = vunpack.c.l.b16 %v353
  %v426 = vunpack.c.h.b16 %v353
  %v427 = vunpack.c.l.b16 %v354
  %v428 = vunpack.c.h.b16 %v354
  %v429 = vunpack.c.l.b16 %v355
  %v430 = vunpack.c.h.b16 %v355
  %v431 = vunpack.c.l.b16 %v356
  %v432 = vunpack.c.h.b16 %v356
  %v433 = vunpack.c.l.b16 %v357
  %v434 = vunpack.c.h.b16 %v357
  %v435 = vunpack.c.l.b16 %v358
  %v436 = vunpack.c.h.b16 %v358
  %v437 = vunpack.c.l.b16 %v359
  %v438 = vunpack.c.h.b16 %v359
  %v439 = vunpack.c.l.b16 %v360
  %v440 = vunpack.c.h.b16 %v360
  %v441 = vunpack.c.l.b16 %v361
  %v442 = vunpack.c.h.b16 %v361
  %v443 = vunpack.c.l.b16 %v362
  %v444 = vunpack.c.h.b16 %v362
  %v445 = vunpack.c.l.b16 %v363
  %v446 = vunpack.c.h.b16 %v363
  %v447 = vunpack.c.l.b16 %v364
  %v448 = vunpack.c.h.b16 %v364
  %v449 = vunpack.c.l.b16 %v365
  %v450 = vunpack.c.h.b16 %v365
  %v451 = vunpack.c.l.b16 %v366
  %v452 = vunpack.c.h.b16 %v366
  %v453 = vunpack.c.l.b16 %v367
  %v454 = vunpack.c.h.b16 %v367
  %v455 = vunpack.c.l.b16 %v368
  %v456 = vunpack.c.h.b16 %v368
  %v457 = vunpack.c.l.b16 %v369
  %v458 = vunpack.c.h.b16 %v369
  %v459 = vunpack.c.l.b16 %v370
  %v460 = vunpack.c.h.b16 %v370
  %v461 = vunpack.c.l.b16 %v371
  %v462 = vunpack.c.h.b16 %v371
  %v463 = vunpack.c.l.b16 %v372
  %v464 = vunpack.c.h.b16 %v372
  %v465 = vunpack.c.l.b16 %v373
  %v466 = vunpack.c.h.b16 %v373
  %v467 = vunpack.c.l.b16 %v374
  %v468 = vunpack.c.h.b16 %v374
  %v469 = vunpack.c.l.b16 %v375
  %v470 = vunpack.c.h.b16 %v375
  %v471 = vunpack.c.l.b16 %v376
  %v472 = vunpack.c.h.b16 %v376
  %v473 = vunpack.c.l.b16 %v377
  %v474 = vunpack.c.h.b16 %v377
  %v475 = vunpack.c.l.b16 %v378
  %v476 = vunpack.c.h.b16 %v378
  %v477 = vunpack.c.l.b16 %v379
  %v478 = vunpack.c.h.b16 %v379
  %v479 = vunpack.c.l.b16 %v380
  %v480 = vunpack.c.h.b16 %v380
  %v481 = vunpack.c.l.b16 %v381
  %v482 = vunpack.c.h.b16 %v381
  %v483 = vunpack.c.l.b16 %v382
  %v484 = vunpack.c.h.b16 %v382
  %v485 = vpack.c.b16 %v425, %v421
  %v486 = vpack.c.b16 %v426, %v422
  %v487 = vpack.c.b16 %v427, %v423
  %v488 = vpack.c.b16 %v428, %v424
  %v489 = vpack.c.b16 %v433, %v429
  %v490 = vpack.c.b16 %v434, %v430
  %v491 = vpack.c.b16 %v435, %v431
  %v492 = vpack.c.b16 %v436, %v432
  %v493 = vpack.c.b16 %v441, %v437
  %v494 = vpack.c.b16 %v442, %v438
  %v495 = vpack.c.b16 %v443, %v439
  %v496 = vpack.c.b16 %v444, %v440
  %v497 = vpack.c.b16 %v449, %v445
  %v498 = vpack.c.b16 %v450, %v446
  %v499 = vpack.c.b16 %v451, %v447
  %v500 = vpack.c.b16 %v452, %v448
  %v501 = vpack.c.b16 %v457, %v453
  %v502 = vpack.c.b16 %v458, %v454
  %v503 = vpack.c.b16 %v459, %v455
  %v504 = vpack.c.b16 %v460, %v456
  %v505 = vpack.c.b16 %v465, %v461
  %v506 = vpack.c.b16 %v466, %v462
  %v507 = vpack.c.b16 %v467, %v463
  %v508 = vpack.c.b16 %v468, %v464
  %v509 = vpack.c.b16 %v473, %v469
  %v510 = vpack.c.b16 %v474, %v470
  %v511 = vpack.c.b16 %v475, %v471
  %v512 = vpack.c.b16 %v476, %v472
  %v513 = vpack.c.b16 %v481, %v477
  %v514 = vpack.c.b16 %v482, %v478
  %v515 = vpack.c.b16 %v483, %v479
  %v516 = vpack.c.b16 %v484, %v480
  %549 = vmatpush.bf16.msra.mxu0 %v513
  %550 = vmatpush.bf16.msra.mxu0 %v509
  %551 = vmatpush.bf16.msra.mxu0 %v505
  %552 = vmatpush.bf16.msra.mxu0 %v501
  %553 = vmatpush.bf16.msra.mxu0 %v497
  %554 = vmatpush.bf16.msra.mxu0 %v493
  %555 = vmatpush.bf16.msra.mxu0 %v489
  %556 = vmatpush.bf16.msra.mxu0 %v485
  %557 = vmatmul.bf16.gmra.mxu0 %v387
  %v558 = vpop.f32.mrf.mxu0
  %v559 = vadd.f32 0.0, %v558
  %v560 = vpop.f32.mrf.mxu0
  %v561 = vadd.f32 0.0, %v560
  %562 = vdwg.mxu0
  %563 = vmatpush.bf16.msra.mxu0 %v514
  %564 = vmatpush.bf16.msra.mxu0 %v510
  %565 = vmatpush.bf16.msra.mxu0 %v506
  %566 = vmatpush.bf16.msra.mxu0 %v502
  %567 = vmatpush.bf16.msra.mxu0 %v498
  %568 = vmatpush.bf16.msra.mxu0 %v494
  %569 = vmatpush.bf16.msra.mxu0 %v490
  %570 = vmatpush.bf16.msra.mxu0 %v486
  %571 = vmatmul.bf16.gmra.mxu0 %v387
  %v572 = vpop.f32.mrf.mxu0
  %v573 = vadd.f32 0.0, %v572
  %v574 = vpop.f32.mrf.mxu0
  %v575 = vadd.f32 0.0, %v574
  %576 = vdwg.mxu0
  %577 = vmatpush.bf16.msra.mxu0 %v515
  %578 = vmatpush.bf16.msra.mxu0 %v511
  %579 = vmatpush.bf16.msra.mxu0 %v507
  %580 = vmatpush.bf16.msra.mxu0 %v503
  %581 = vmatpush.bf16.msra.mxu0 %v499
  %582 = vmatpush.bf16.msra.mxu0 %v495
  %583 = vmatpush.bf16.msra.mxu0 %v491
  %584 = vmatpush.bf16.msra.mxu0 %v487
  %585 = vmatmul.bf16.gmra.mxu0 %v387
  %v586 = vpop.f32.mrf.mxu0
  %v587 = vadd.f32 0.0, %v586
  %v588 = vpop.f32.mrf.mxu0
  %v589 = vadd.f32 0.0, %v588
  %590 = vdwg.mxu0
  %591 = vmatpush.bf16.msra.mxu0 %v516
  %592 = vmatpush.bf16.msra.mxu0 %v512
  %593 = vmatpush.bf16.msra.mxu0 %v508
  %594 = vmatpush.bf16.msra.mxu0 %v504
  %595 = vmatpush.bf16.msra.mxu0 %v500
  %596 = vmatpush.bf16.msra.mxu0 %v496
  %597 = vmatpush.bf16.msra.mxu0 %v492
  %598 = vmatpush.bf16.msra.mxu0 %v488
  %599 = vmatmul.bf16.gmra.mxu0 %v387
  %v600 = vpop.f32.mrf.mxu0
  %v601 = vadd.f32 0.0, %v600
  %v602 = vpop.f32.mrf.mxu0
  %v603 = vadd.f32 0.0, %v602
  %604 = vdwg.mxu0
  %v605 = vmax.f32 %v559, 0.0
  %v606 = vmax.f32 %v573, 0.0
  %v607 = vmax.f32 %v587, 0.0
  %v608 = vmax.f32 %v601, 0.0
  %v609 = vmax.f32 %v561, 0.0
  %v610 = vmax.f32 %v575, 0.0
  %v611 = vmax.f32 %v589, 0.0
  %v612 = vmax.f32 %v603, 0.0
  %v613 = vpack.c.bf16 %v606, %v605
  %v614 = vpack.c.bf16 %v608, %v607
  %v615 = vpack.c.bf16 %v610, %v609
  %v616 = vpack.c.bf16 %v612, %v611
  %617 = vst [vmem:[#allocation2 + $0x60] sm:$0xff] %v613
  %618 = vst [vmem:[#allocation2 + $0x68] sm:$0xff] %v614
  %619 = vst [vmem:[#allocation2 + $0x70] sm:$0xff] %v615
  %620 = vst [vmem:[#allocation2 + $0x78] sm:$0xff] %v616
  %s621 = scalar_lea.vmem %s0, 16
  %v622 = vld [vmem:[%s621] sm:$0xf]
  %v623 = vld [vmem:[%s621 + $0x4] sm:$0xf]
  %v624 = vld [vmem:[#allocation2] sm:$0xff]
  %v625 = vld [vmem:[#allocation2 + $0x8] sm:$0xff]
  %v626 = vld [vmem:[#allocation2 + $0x10] sm:$0xff]
  %v627 = vld [vmem:[#allocation2 + $0x18] sm:$0xff]
  %v628 = vld [vmem:[#allocation2 + $0x20] sm:$0xff]
  %v629 = vld [vmem:[#allocation2 + $0x28] sm:$0xff]
  %v630 = vld [vmem:[#allocation2 + $0x30] sm:$0xff]
  %v631 = vld [vmem:[#allocation2 + $0x38] sm:$0xff]
  %v632 = vld [vmem:[#allocation2 + $0x40] sm:$0xff]
  %v633 = vld [vmem:[#allocation2 + $0x48] sm:$0xff]
  %v634 = vld [vmem:[#allocation2 + $0x50] sm:$0xff]
  %v635 = vld [vmem:[#allocation2 + $0x58] sm:$0xff]
  %v636 = vld [vmem:[#allocation2 + $0x60] sm:$0xff]
  %v637 = vld [vmem:[#allocation2 + $0x68] sm:$0xff]
  %v638 = vld [vmem:[#allocation2 + $0x70] sm:$0xff]
  %v639 = vld [vmem:[#allocation2 + $0x78] sm:$0xff]
  %v640 = vld [vmem:[#allocation2 + $0x80] sm:$0xff]
  %v641 = vld [vmem:[#allocation2 + $0x88] sm:$0xff]
  %v642 = vld [vmem:[#allocation2 + $0x90] sm:$0xff]
  %v643 = vld [vmem:[#allocation2 + $0x98] sm:$0xff]
  %v644 = vld [vmem:[#allocation2 + $0xa0] sm:$0xff]
  %v645 = vld [vmem:[#allocation2 + $0xa8] sm:$0xff]
  %v646 = vld [vmem:[#allocation2 + $0xb0] sm:$0xff]
  %v647 = vld [vmem:[#allocation2 + $0xb8] sm:$0xff]
  %v648 = vld [vmem:[#allocation2 + $0xc0] sm:$0xff]
  %v649 = vld [vmem:[#allocation2 + $0xc8] sm:$0xff]
  %v650 = vld [vmem:[#allocation2 + $0xd0] sm:$0xff]
  %v651 = vld [vmem:[#allocation2 + $0xd8] sm:$0xff]
  %v652 = vld [vmem:[#allocation2 + $0xe0] sm:$0xff]
  %v653 = vld [vmem:[#allocation2 + $0xe8] sm:$0xff]
  %v654 = vld [vmem:[#allocation2 + $0xf0] sm:$0xff]
  %v655 = vld [vmem:[#allocation2 + $0xf8] sm:$0xff]
  %v658 = vunpack.c.l.b16 %v622
  %v659 = vunpack.c.l.b16 %v623
  %v660 = vpack.c.b16 %v659, %v658
  %v694 = vunpack.c.l.b16 %v624
  %v695 = vunpack.c.h.b16 %v624
  %v696 = vunpack.c.l.b16 %v625
  %v697 = vunpack.c.h.b16 %v625
  %v698 = vunpack.c.l.b16 %v626
  %v699 = vunpack.c.h.b16 %v626
  %v700 = vunpack.c.l.b16 %v627
  %v701 = vunpack.c.h.b16 %v627
  %v702 = vunpack.c.l.b16 %v628
  %v703 = vunpack.c.h.b16 %v628
  %v704 = vunpack.c.l.b16 %v629
  %v705 = vunpack.c.h.b16 %v629
  %v706 = vunpack.c.l.b16 %v630
  %v707 = vunpack.c.h.b16 %v630
  %v708 = vunpack.c.l.b16 %v631
  %v709 = vunpack.c.h.b16 %v631
  %v710 = vunpack.c.l.b16 %v632
  %v711 = vunpack.c.h.b16 %v632
  %v712 = vunpack.c.l.b16 %v633
  %v713 = vunpack.c.h.b16 %v633
  %v714 = vunpack.c.l.b16 %v634
  %v715 = vunpack.c.h.b16 %v634
  %v716 = vunpack.c.l.b16 %v635
  %v717 = vunpack.c.h.b16 %v635
  %v718 = vunpack.c.l.b16 %v636
  %v719 = vunpack.c.h.b16 %v636
  %v720 = vunpack.c.l.b16 %v637
  %v721 = vunpack.c.h.b16 %v637
  %v722 = vunpack.c.l.b16 %v638
  %v723 = vunpack.c.h.b16 %v638
  %v724 = vunpack.c.l.b16 %v639
  %v725 = vunpack.c.h.b16 %v639
  %v726 = vunpack.c.l.b16 %v640
  %v727 = vunpack.c.h.b16 %v640
  %v728 = vunpack.c.l.b16 %v641
  %v729 = vunpack.c.h.b16 %v641
  %v730 = vunpack.c.l.b16 %v642
  %v731 = vunpack.c.h.b16 %v642
  %v732 = vunpack.c.l.b16 %v643
  %v733 = vunpack.c.h.b16 %v643
  %v734 = vunpack.c.l.b16 %v644
  %v735 = vunpack.c.h.b16 %v644
  %v736 = vunpack.c.l.b16 %v645
  %v737 = vunpack.c.h.b16 %v645
  %v738 = vunpack.c.l.b16 %v646
  %v739 = vunpack.c.h.b16 %v646
  %v740 = vunpack.c.l.b16 %v647
  %v741 = vunpack.c.h.b16 %v647
  %v742 = vunpack.c.l.b16 %v648
  %v743 = vunpack.c.h.b16 %v648
  %v744 = vunpack.c.l.b16 %v649
  %v745 = vunpack.c.h.b16 %v649
  %v746 = vunpack.c.l.b16 %v650
  %v747 = vunpack.c.h.b16 %v650
  %v748 = vunpack.c.l.b16 %v651
  %v749 = vunpack.c.h.b16 %v651
  %v750 = vunpack.c.l.b16 %v652
  %v751 = vunpack.c.h.b16 %v652
  %v752 = vunpack.c.l.b16 %v653
  %v753 = vunpack.c.h.b16 %v653
  %v754 = vunpack.c.l.b16 %v654
  %v755 = vunpack.c.h.b16 %v654
  %v756 = vunpack.c.l.b16 %v655
  %v757 = vunpack.c.h.b16 %v655
  %v758 = vpack.c.b16 %v698, %v694
  %v759 = vpack.c.b16 %v699, %v695
  %v760 = vpack.c.b16 %v700, %v696
  %v761 = vpack.c.b16 %v701, %v697
  %v762 = vpack.c.b16 %v706, %v702
  %v763 = vpack.c.b16 %v707, %v703
  %v764 = vpack.c.b16 %v708, %v704
  %v765 = vpack.c.b16 %v709, %v705
  %v766 = vpack.c.b16 %v714, %v710
  %v767 = vpack.c.b16 %v715, %v711
  %v768 = vpack.c.b16 %v716, %v712
  %v769 = vpack.c.b16 %v717, %v713
  %v770 = vpack.c.b16 %v722, %v718
  %v771 = vpack.c.b16 %v723, %v719
  %v772 = vpack.c.b16 %v724, %v720
  %v773 = vpack.c.b16 %v725, %v721
  %v774 = vpack.c.b16 %v730, %v726
  %v775 = vpack.c.b16 %v731, %v727
  %v776 = vpack.c.b16 %v732, %v728
  %v777 = vpack.c.b16 %v733, %v729
  %v778 = vpack.c.b16 %v738, %v734
  %v779 = vpack.c.b16 %v739, %v735
  %v780 = vpack.c.b16 %v740, %v736
  %v781 = vpack.c.b16 %v741, %v737
  %v782 = vpack.c.b16 %v746, %v742
  %v783 = vpack.c.b16 %v747, %v743
  %v784 = vpack.c.b16 %v748, %v744
  %v785 = vpack.c.b16 %v749, %v745
  %v786 = vpack.c.b16 %v754, %v750
  %v787 = vpack.c.b16 %v755, %v751
  %v788 = vpack.c.b16 %v756, %v752
  %v789 = vpack.c.b16 %v757, %v753
  %822 = vmatpush.bf16.msra.mxu0 %v786
  %823 = vmatpush.bf16.msra.mxu0 %v782
  %824 = vmatpush.bf16.msra.mxu0 %v778
  %825 = vmatpush.bf16.msra.mxu0 %v774
  %826 = vmatpush.bf16.msra.mxu0 %v770
  %827 = vmatpush.bf16.msra.mxu0 %v766
  %828 = vmatpush.bf16.msra.mxu0 %v762
  %829 = vmatpush.bf16.msra.mxu0 %v758
  %830 = vmatmul.bf16.gmra.mxu0 %v660
  %v831 = vpop.f32.mrf.mxu0
  %v832 = vadd.f32 0.0, %v831
  %v833 = vpop.f32.mrf.mxu0
  %v834 = vadd.f32 0.0, %v833
  %835 = vdwg.mxu0
  %836 = vmatpush.bf16.msra.mxu0 %v787
  %837 = vmatpush.bf16.msra.mxu0 %v783
  %838 = vmatpush.bf16.msra.mxu0 %v779
  %839 = vmatpush.bf16.msra.mxu0 %v775
  %840 = vmatpush.bf16.msra.mxu0 %v771
  %841 = vmatpush.bf16.msra.mxu0 %v767
  %842 = vmatpush.bf16.msra.mxu0 %v763
  %843 = vmatpush.bf16.msra.mxu0 %v759
  %844 = vmatmul.bf16.gmra.mxu0 %v660
  %v845 = vpop.f32.mrf.mxu0
  %v846 = vadd.f32 0.0, %v845
  %v847 = vpop.f32.mrf.mxu0
  %v848 = vadd.f32 0.0, %v847
  %849 = vdwg.mxu0
  %850 = vmatpush.bf16.msra.mxu0 %v788
  %851 = vmatpush.bf16.msra.mxu0 %v784
  %852 = vmatpush.bf16.msra.mxu0 %v780
  %853 = vmatpush.bf16.msra.mxu0 %v776
  %854 = vmatpush.bf16.msra.mxu0 %v772
  %855 = vmatpush.bf16.msra.mxu0 %v768
  %856 = vmatpush.bf16.msra.mxu0 %v764
  %857 = vmatpush.bf16.msra.mxu0 %v760
  %858 = vmatmul.bf16.gmra.mxu0 %v660
  %v859 = vpop.f32.mrf.mxu0
  %v860 = vadd.f32 0.0, %v859
  %v861 = vpop.f32.mrf.mxu0
  %v862 = vadd.f32 0.0, %v861
  %863 = vdwg.mxu0
  %864 = vmatpush.bf16.msra.mxu0 %v789
  %865 = vmatpush.bf16.msra.mxu0 %v785
  %866 = vmatpush.bf16.msra.mxu0 %v781
  %867 = vmatpush.bf16.msra.mxu0 %v777
  %868 = vmatpush.bf16.msra.mxu0 %v773
  %869 = vmatpush.bf16.msra.mxu0 %v769
  %870 = vmatpush.bf16.msra.mxu0 %v765
  %871 = vmatpush.bf16.msra.mxu0 %v761
  %872 = vmatmul.bf16.gmra.mxu0 %v660
  %v873 = vpop.f32.mrf.mxu0
  %v874 = vadd.f32 0.0, %v873
  %v875 = vpop.f32.mrf.mxu0
  %v876 = vadd.f32 0.0, %v875
  %877 = vdwg.mxu0
  %v878 = vmax.f32 %v832, 0.0
  %v879 = vmax.f32 %v846, 0.0
  %v880 = vmax.f32 %v860, 0.0
  %v881 = vmax.f32 %v874, 0.0
  %v882 = vmax.f32 %v834, 0.0
  %v883 = vmax.f32 %v848, 0.0
  %v884 = vmax.f32 %v862, 0.0
  %v885 = vmax.f32 %v876, 0.0
  %v886 = vpack.c.bf16 %v879, %v878
  %v887 = vpack.c.bf16 %v881, %v880
  %v888 = vpack.c.bf16 %v883, %v882
  %v889 = vpack.c.bf16 %v885, %v884
  %890 = vst [vmem:[#allocation2 + $0xa0] sm:$0xff] %v886
  %891 = vst [vmem:[#allocation2 + $0xa8] sm:$0xff] %v887
  %892 = vst [vmem:[#allocation2 + $0xb0] sm:$0xff] %v888
  %893 = vst [vmem:[#allocation2 + $0xb8] sm:$0xff] %v889
  %s894 = scalar_lea.vmem %s0, 24
  %v895 = vld [vmem:[%s894] sm:$0xf]
  %v896 = vld [vmem:[%s894 + $0x4] sm:$0xf]
  %v897 = vld [vmem:[#allocation2] sm:$0xff]
  %v898 = vld [vmem:[#allocation2 + $0x8] sm:$0xff]
  %v899 = vld [vmem:[#allocation2 + $0x10] sm:$0xff]
  %v900 = vld [vmem:[#allocation2 + $0x18] sm:$0xff]
  %v901 = vld [vmem:[#allocation2 + $0x20] sm:$0xff]
  %v902 = vld [vmem:[#allocation2 + $0x28] sm:$0xff]
  %v903 = vld [vmem:[#allocation2 + $0x30] sm:$0xff]
  %v904 = vld [vmem:[#allocation2 + $0x38] sm:$0xff]
  %v905 = vld [vmem:[#allocation2 + $0x40] sm:$0xff]
  %v906 = vld [vmem:[#allocation2 + $0x48] sm:$0xff]
  %v907 = vld [vmem:[#allocation2 + $0x50] sm:$0xff]
  %v908 = vld [vmem:[#allocation2 + $0x58] sm:$0xff]
  %v909 = vld [vmem:[#allocation2 + $0x60] sm:$0xff]
  %v910 = vld [vmem:[#allocation2 + $0x68] sm:$0xff]
  %v911 = vld [vmem:[#allocation2 + $0x70] sm:$0xff]
  %v912 = vld [vmem:[#allocation2 + $0x78] sm:$0xff]
  %v913 = vld [vmem:[#allocation2 + $0x80] sm:$0xff]
  %v914 = vld [vmem:[#allocation2 + $0x88] sm:$0xff]
  %v915 = vld [vmem:[#allocation2 + $0x90] sm:$0xff]
  %v916 = vld [vmem:[#allocation2 + $0x98] sm:$0xff]
  %v917 = vld [vmem:[#allocation2 + $0xa0] sm:$0xff]
  %v918 = vld [vmem:[#allocation2 + $0xa8] sm:$0xff]
  %v919 = vld [vmem:[#allocation2 + $0xb0] sm:$0xff]
  %v920 = vld [vmem:[#allocation2 + $0xb8] sm:$0xff]
  %v921 = vld [vmem:[#allocation2 + $0xc0] sm:$0xff]
  %v922 = vld [vmem:[#allocation2 + $0xc8] sm:$0xff]
  %v923 = vld [vmem:[#allocation2 + $0xd0] sm:$0xff]
  %v924 = vld [vmem:[#allocation2 + $0xd8] sm:$0xff]
  %v925 = vld [vmem:[#allocation2 + $0xe0] sm:$0xff]
  %v926 = vld [vmem:[#allocation2 + $0xe8] sm:$0xff]
  %v927 = vld [vmem:[#allocation2 + $0xf0] sm:$0xff]
  %v928 = vld [vmem:[#allocation2 + $0xf8] sm:$0xff]
  %v931 = vunpack.c.l.b16 %v895
  %v932 = vunpack.c.l.b16 %v896
  %v933 = vpack.c.b16 %v932, %v931
  %v967 = vunpack.c.l.b16 %v897
  %v968 = vunpack.c.h.b16 %v897
  %v969 = vunpack.c.l.b16 %v898
  %v970 = vunpack.c.h.b16 %v898
  %v971 = vunpack.c.l.b16 %v899
  %v972 = vunpack.c.h.b16 %v899
  %v973 = vunpack.c.l.b16 %v900
  %v974 = vunpack.c.h.b16 %v900
  %v975 = vunpack.c.l.b16 %v901
  %v976 = vunpack.c.h.b16 %v901
  %v977 = vunpack.c.l.b16 %v902
  %v978 = vunpack.c.h.b16 %v902
  %v979 = vunpack.c.l.b16 %v903
  %v980 = vunpack.c.h.b16 %v903
  %v981 = vunpack.c.l.b16 %v904
  %v982 = vunpack.c.h.b16 %v904
  %v983 = vunpack.c.l.b16 %v905
  %v984 = vunpack.c.h.b16 %v905
  %v985 = vunpack.c.l.b16 %v906
  %v986 = vunpack.c.h.b16 %v906
  %v987 = vunpack.c.l.b16 %v907
  %v988 = vunpack.c.h.b16 %v907
  %v989 = vunpack.c.l.b16 %v908
  %v990 = vunpack.c.h.b16 %v908
  %v991 = vunpack.c.l.b16 %v909
  %v992 = vunpack.c.h.b16 %v909
  %v993 = vunpack.c.l.b16 %v910
  %v994 = vunpack.c.h.b16 %v910
  %v995 = vunpack.c.l.b16 %v911
  %v996 = vunpack.c.h.b16 %v911
  %v997 = vunpack.c.l.b16 %v912
  %v998 = vunpack.c.h.b16 %v912
  %v999 = vunpack.c.l.b16 %v913
  %v1000 = vunpack.c.h.b16 %v913
  %v1001 = vunpack.c.l.b16 %v914
  %v1002 = vunpack.c.h.b16 %v914
  %v1003 = vunpack.c.l.b16 %v915
  %v1004 = vunpack.c.h.b16 %v915
  %v1005 = vunpack.c.l.b16 %v916
  %v1006 = vunpack.c.h.b16 %v916
  %v1007 = vunpack.c.l.b16 %v917
  %v1008 = vunpack.c.h.b16 %v917
  %v1009 = vunpack.c.l.b16 %v918
  %v1010 = vunpack.c.h.b16 %v918
  %v1011 = vunpack.c.l.b16 %v919
  %v1012 = vunpack.c.h.b16 %v919
  %v1013 = vunpack.c.l.b16 %v920
  %v1014 = vunpack.c.h.b16 %v920
  %v1015 = vunpack.c.l.b16 %v921
  %v1016 = vunpack.c.h.b16 %v921
  %v1017 = vunpack.c.l.b16 %v922
  %v1018 = vunpack.c.h.b16 %v922
  %v1019 = vunpack.c.l.b16 %v923
  %v1020 = vunpack.c.h.b16 %v923
  %v1021 = vunpack.c.l.b16 %v924
  %v1022 = vunpack.c.h.b16 %v924
  %v1023 = vunpack.c.l.b16 %v925
  %v1024 = vunpack.c.h.b16 %v925
  %v1025 = vunpack.c.l.b16 %v926
  %v1026 = vunpack.c.h.b16 %v926
  %v1027 = vunpack.c.l.b16 %v927
  %v1028 = vunpack.c.h.b16 %v927
  %v1029 = vunpack.c.l.b16 %v928
  %v1030 = vunpack.c.h.b16 %v928
  %v1031 = vpack.c.b16 %v971, %v967
  %v1032 = vpack.c.b16 %v972, %v968
  %v1033 = vpack.c.b16 %v973, %v969
  %v1034 = vpack.c.b16 %v974, %v970
  %v1035 = vpack.c.b16 %v979, %v975
  %v1036 = vpack.c.b16 %v980, %v976
  %v1037 = vpack.c.b16 %v981, %v977
  %v1038 = vpack.c.b16 %v982, %v978
  %v1039 = vpack.c.b16 %v987, %v983
  %v1040 = vpack.c.b16 %v988, %v984
  %v1041 = vpack.c.b16 %v989, %v985
  %v1042 = vpack.c.b16 %v990, %v986
  %v1043 = vpack.c.b16 %v995, %v991
  %v1044 = vpack.c.b16 %v996, %v992
  %v1045 = vpack.c.b16 %v997, %v993
  %v1046 = vpack.c.b16 %v998, %v994
  %v1047 = vpack.c.b16 %v1003, %v999
  %v1048 = vpack.c.b16 %v1004, %v1000
  %v1049 = vpack.c.b16 %v1005, %v1001
  %v1050 = vpack.c.b16 %v1006, %v1002
  %v1051 = vpack.c.b16 %v1011, %v1007
  %v1052 = vpack.c.b16 %v1012, %v1008
  %v1053 = vpack.c.b16 %v1013, %v1009
  %v1054 = vpack.c.b16 %v1014, %v1010
  %v1055 = vpack.c.b16 %v1019, %v1015
  %v1056 = vpack.c.b16 %v1020, %v1016
  %v1057 = vpack.c.b16 %v1021, %v1017
  %v1058 = vpack.c.b16 %v1022, %v1018
  %v1059 = vpack.c.b16 %v1027, %v1023
  %v1060 = vpack.c.b16 %v1028, %v1024
  %v1061 = vpack.c.b16 %v1029, %v1025
  %v1062 = vpack.c.b16 %v1030, %v1026
  %1095 = vmatpush.bf16.msra.mxu0 %v1059
  %1096 = vmatpush.bf16.msra.mxu0 %v1055
  %1097 = vmatpush.bf16.msra.mxu0 %v1051
  %1098 = vmatpush.bf16.msra.mxu0 %v1047
  %1099 = vmatpush.bf16.msra.mxu0 %v1043
  %1100 = vmatpush.bf16.msra.mxu0 %v1039
  %1101 = vmatpush.bf16.msra.mxu0 %v1035
  %1102 = vmatpush.bf16.msra.mxu0 %v1031
  %1103 = vmatmul.bf16.gmra.mxu0 %v933
  %v1104 = vpop.f32.mrf.mxu0
  %v1105 = vadd.f32 0.0, %v1104
  %v1106 = vpop.f32.mrf.mxu0
  %v1107 = vadd.f32 0.0, %v1106
  %1108 = vdwg.mxu0
  %1109 = vmatpush.bf16.msra.mxu0 %v1060
  %1110 = vmatpush.bf16.msra.mxu0 %v1056
  %1111 = vmatpush.bf16.msra.mxu0 %v1052
  %1112 = vmatpush.bf16.msra.mxu0 %v1048
  %1113 = vmatpush.bf16.msra.mxu0 %v1044
  %1114 = vmatpush.bf16.msra.mxu0 %v1040
  %1115 = vmatpush.bf16.msra.mxu0 %v1036
  %1116 = vmatpush.bf16.msra.mxu0 %v1032
  %1117 = vmatmul.bf16.gmra.mxu0 %v933
  %v1118 = vpop.f32.mrf.mxu0
  %v1119 = vadd.f32 0.0, %v1118
  %v1120 = vpop.f32.mrf.mxu0
  %v1121 = vadd.f32 0.0, %v1120
  %1122 = vdwg.mxu0
  %1123 = vmatpush.bf16.msra.mxu0 %v1061
  %1124 = vmatpush.bf16.msra.mxu0 %v1057
  %1125 = vmatpush.bf16.msra.mxu0 %v1053
  %1126 = vmatpush.bf16.msra.mxu0 %v1049
  %1127 = vmatpush.bf16.msra.mxu0 %v1045
  %1128 = vmatpush.bf16.msra.mxu0 %v1041
  %1129 = vmatpush.bf16.msra.mxu0 %v1037
  %1130 = vmatpush.bf16.msra.mxu0 %v1033
  %1131 = vmatmul.bf16.gmra.mxu0 %v933
  %v1132 = vpop.f32.mrf.mxu0
  %v1133 = vadd.f32 0.0, %v1132
  %v1134 = vpop.f32.mrf.mxu0
  %v1135 = vadd.f32 0.0, %v1134
  %1136 = vdwg.mxu0
  %1137 = vmatpush.bf16.msra.mxu0 %v1062
  %1138 = vmatpush.bf16.msra.mxu0 %v1058
  %1139 = vmatpush.bf16.msra.mxu0 %v1054
  %1140 = vmatpush.bf16.msra.mxu0 %v1050
  %1141 = vmatpush.bf16.msra.mxu0 %v1046
  %1142 = vmatpush.bf16.msra.mxu0 %v1042
  %1143 = vmatpush.bf16.msra.mxu0 %v1038
  %1144 = vmatpush.bf16.msra.mxu0 %v1034
  %1145 = vmatmul.bf16.gmra.mxu0 %v933
  %v1146 = vpop.f32.mrf.mxu0
  %v1147 = vadd.f32 0.0, %v1146
  %v1148 = vpop.f32.mrf.mxu0
  %v1149 = vadd.f32 0.0, %v1148
  %1150 = vdwg.mxu0
  %v1151 = vmax.f32 %v1105, 0.0
  %v1152 = vmax.f32 %v1119, 0.0
  %v1153 = vmax.f32 %v1133, 0.0
  %v1154 = vmax.f32 %v1147, 0.0
  %v1155 = vmax.f32 %v1107, 0.0
  %v1156 = vmax.f32 %v1121, 0.0
  %v1157 = vmax.f32 %v1135, 0.0
  %v1158 = vmax.f32 %v1149, 0.0
  %1159 = vst [vmem:[%s2] sm:$0xff] %v1151
  %1160 = vst [vmem:[%s2 + $0x8] sm:$0xff] %v1152
  %1161 = vst [vmem:[%s2 + $0x10] sm:$0xff] %v1155
  %1162 = vst [vmem:[%s2 + $0x18] sm:$0xff] %v1156
  %s1163 = scalar_lea.vmem %s2, 32
  %1164 = vst [vmem:[%s1163] sm:$0xff] %v1153
  %1165 = vst [vmem:[%s1163 + $0x8] sm:$0xff] %v1154
  %1166 = vst [vmem:[%s1163 + $0x10] sm:$0xff] %v1157
  %1167 = vst [vmem:[%s1163 + $0x18] sm:$0xff] %v1158
  // Predicated region
  $region10: #{multi_dense_mlp_forward.1} parent=0 // pred_check
    _
  $region11: #{multi_dense_mlp_forward.1} parent=0 // pred_check_branch
    %1169 = sbr.rel (0) target = $region13
  $region12: #{multi_dense_mlp_forward.1} parent=0 // pred_region
    _
  $region13: #{multi_dense_mlp_forward.1} parent=0 // pred_fallthru
    _
  // Predicated region
  $region14: #{multi_dense_mlp_forward.1} parent=0 // pred_check
    _
  $region15: #{multi_dense_mlp_forward.1} parent=0 // pred_check_branch
    %1171 = sbr.rel (0) target = $region17
  $region16: #{multi_dense_mlp_forward.1} parent=0 // pred_region
    _
  $region17: #{multi_dense_mlp_forward.1} parent=0 // pred_fallthru
    _

</llo_original>
